<compile_context>
chip_gen: v6e
topology: v6e:2x2x1
jax: 0.10.0
libtpu: 0.0.40
codegen_flags: <defaults>
</compile_context>

<pallas_src>
import jax
import jax.numpy as jnp
from jax.experimental import pallas as pl
from jax.experimental.pallas import tpu as pltpu


def _upsample_conv_kernel(x_ref, halo_ref, w_ref, b_ref, o_ref):
    # x_ref   : (1, Ht, W, C)     body rows of the ORIGINAL-resolution input
    # halo_ref: (1, 1, 2, W, C)   circular top/bottom halo rows for this tile
    # w_ref   : (9*C, 4*C)        phase-folded im2col weights
    # b_ref   : (1, 4*C)          bias tiled over the 4 output phases
    # o_ref   : (1, Ht, W, 4*C)   4 phase planes folded into the lane dim
    _, ht, w, c = x_ref.shape

    body = x_ref[0]                                                # (Ht, W, C)
    halo = halo_ref[0, 0]                                          # (2,  W, C)

    # Row-extended slab: xe[k] holds original row (row0 + k - 1) mod H.
    xe = jnp.concatenate([halo[0:1], body, halo[1:2]], axis=0)     # (Ht+2,W,C)

    # Circular column shifts done ONCE on the extended slab (wrap in W).
    xl = jnp.concatenate([xe[:, w - 1:], xe[:, :w - 1]], axis=1)   # col j-1
    xr = jnp.concatenate([xe[:, 1:], xe[:, :1]], axis=1)           # col j+1
    cols = (xl, xe, xr)                        # s = 0,1,2 -> column offset s-1

    # 9 deduplicated (Ht, W, C) windows (row offset r-1, col offset s-1),
    # r-major / s-minor, concatenated into a single im2col LHS.
    wins = [cols[s][r:r + ht] for r in range(3) for s in range(3)]
    lhs = jnp.concatenate(wins, axis=-1).reshape(ht * w, 9 * c)

    # One MXU matmul produces all 4 output phases at once (K=9C, N=4C),
    # accumulated in f32; no zero-init / accumulator adds needed.
    out = jnp.dot(lhs.astype(w_ref.dtype), w_ref[...],
                  preferred_element_type=jnp.float32)              # (Ht*W,4C)
    out = out + b_ref[...].astype(jnp.float32)
    # Lane-dense single store (last dim 4C).
    # TODO(synk): for production cases with C < 128 the lane dim is still
    # under-occupied; folding W into lanes (or padding C) would fix that.
    o_ref[0] = out.reshape(ht, w, 4 * c).astype(o_ref.dtype)


def _fold_phase_weights_im2col(w_hwio):
    """Fold the 3x3 conv over the 2x-nearest-upsampled image into a single
    im2col weight of shape (9*Cin, 4*Cout).

    Rows are ordered (row-offset r, col-offset s, ci) with offsets r-1, s-1 in
    {-1,0,1} on the ORIGINAL-resolution image; columns are ordered
    (phase py, phase px, co)."""
    # S[p, k, r] = 1 iff conv tap k (one axis) for output phase p reads source
    # offset r-1 on that axis:  offset = floor((p + k - 1) / 2).
    S = jnp.array([[[1, 0, 0], [0, 1, 0], [0, 1, 0]],    # phase 0: taps -> {-1,0,0}
                   [[0, 1, 0], [0, 1, 0], [0, 0, 1]]],   # phase 1: taps -> {0,0,+1}
                  dtype=w_hwio.dtype)
    wf = jnp.einsum('pkr,qls,klio->rsipqo', S, S, w_hwio)   # (3,3,Ci,2,2,Co)
    _, _, ci, co = w_hwio.shape
    return wf.reshape(9 * ci, 4 * co)


def _vmem_budget_bytes():
    """Generation-aware working-set budget + scoped VMEM limit."""
    try:
        cap = getattr(pltpu.get_tpu_info(), "vmem_capacity_bytes", 128 << 20)
    except Exception:  # pragma: no cover - conservative fallback
        cap = 128 << 20
    budget = min(20 << 20, cap // 4)      # v5e/v6e: 20 MiB, v7x (64 MiB): 16 MiB
    limit = int(min(cap // 2, 64 << 20))  # raise scoped limit, stay << physical
    return budget, limit


def _pick_row_tile(H, W, C, itemsize, budget_bytes):
    """Largest divisor of H whose full working set fits the budget: the
    double-buffered body/halo/output blocks, the grid-invariant (double
    buffered) weight+bias blocks, and the in-kernel im2col temporaries."""
    fixed = 2 * (9 * C * 4 * C + 4 * C) * itemsize           # weights + bias
    for ht in range(H, 0, -1):
        if H % ht:
            continue
        body = ht * W * C * itemsize
        halo = 2 * W * C * itemsize
        outb = ht * W * 4 * C * itemsize
        # extended slab + 2 column shifts + im2col LHS + f32 matmul result
        tmp = (3 * (ht + 2) + 9 * ht) * W * C * itemsize + ht * W * 4 * C * 4
        if fixed + 2 * (body + halo + outb) + tmp <= budget_bytes:
            return ht
    return 1


def _upsample_conv3x3_circular(x_nhwc, w_hwio, b, *, row_tile=None,
                               compute_dtype=None):
    N, H, W, C = x_nhwc.shape
    budget, vmem_limit = _vmem_budget_bytes()
    if row_tile is None:
        row_tile = _pick_row_tile(H, W, C, x_nhwc.dtype.itemsize, budget)
    elif H % row_tile:
        raise ValueError(f"row_tile={row_tile} must divide H={H}")
    Ht = row_tile
    T = H // Ht
    # TODO(synk): ragged (cdiv) row tiles would need per-tile wrap handling for
    # the bottom halo of a partial last tile; divisors of H are required here.

    # Tiny circular row-halo side input: 2 rows per tile (rows row0-1 and
    # row0+Ht, mod H).  ~(2/Ht) of the input in extra HBM traffic; replaces
    # the old full overlapping-tile stack.  Column wrap is handled in-kernel.
    rows = jnp.arange(T) * Ht
    row_idx = jnp.stack([(rows - 1) % H, (rows + Ht) % H], axis=1)   # (T, 2)
    halo = x_nhwc[:, row_idx]                                        # (N,T,2,W,C)

    wf = _fold_phase_weights_im2col(w_hwio)                          # (9C, 4C)
    if compute_dtype is not None:
        wf = wf.astype(compute_dtype)          # e.g. bf16 MXU path (f32 accum)
    b4 = jnp.tile(b.reshape(-1), 4).reshape(1, 4 * C).astype(jnp.float32)

    out = pl.pallas_call(
        _upsample_conv_kernel,
        out_shape=jax.ShapeDtypeStruct((N, H, W, 4 * C), x_nhwc.dtype),
        grid_spec=pltpu.PrefetchScalarGridSpec(
            num_scalar_prefetch=0,
            # Both axes parallel (megacore / v7x dual-TC friendly).
            grid=(N, T),
            in_specs=[
                pl.BlockSpec((1, Ht, W, C), lambda n, t: (n, t, 0, 0)),
                pl.BlockSpec((1, 1, 2, W, C), lambda n, t: (n, t, 0, 0, 0)),
                # TODO(synk): the two grid-invariant blocks below could use
                # pipeline_mode=pl.Buffered(1) to halve their VMEM footprint.
                pl.BlockSpec((9 * C, 4 * C), lambda n, t: (0, 0)),
                pl.BlockSpec((1, 4 * C), lambda n, t: (0, 0)),
            ],
            out_specs=pl.BlockSpec((1, Ht, W, 4 * C), lambda n, t: (n, t, 0, 0)),
        ),
        compiler_params=pltpu.CompilerParams(
            dimension_semantics=("parallel", "parallel"),
            vmem_limit_bytes=vmem_limit),
    )(x_nhwc, halo, wf, b4)

    # Interleave the 4 phases AND convert NHWC->NCHW in a single transpose
    # (the NCHW boundary transpose was required anyway).
    out = out.reshape(N, H, W, 2, 2, C)              # (n, i, j, py, px, c)
    return out.transpose(0, 5, 1, 3, 2, 4).reshape(N, C, 2 * H, 2 * W)


def upsample_forward(x_nchw, w_hwio=None, b=None, *, with_conv=True,
                     row_tile=None, compute_dtype=None):
    """Equivalent of Upsample.forward. Input/output are NCHW like PyTorch."""
    if not with_conv:
        # TODO(synk): with_conv=False is a pure nearest-neighbor gather (data
        # movement only); kept in plain JAX rather than a Pallas kernel.
        return jnp.repeat(jnp.repeat(x_nchw, 2, axis=2), 2, axis=3)
    x_nhwc = jnp.transpose(x_nchw, (0, 2, 3, 1))     # NCHW -> NHWC
    return _upsample_conv3x3_circular(x_nhwc, w_hwio, b, row_tile=row_tile,
                                      compute_dtype=compute_dtype)


def _reference_forward(x_nchw, w_hwio, b, with_conv=True):
    """Pure-JAX reference (nearest upsample + wrap pad + lax conv)."""
    x = jnp.transpose(x_nchw, (0, 2, 3, 1))
    x = jnp.repeat(jnp.repeat(x, 2, axis=1), 2, axis=2)
    if with_conv:
        xp = jnp.pad(x, ((0, 0), (1, 1), (1, 1), (0, 0)), mode="wrap")
        x = jax.lax.conv_general_dilated(
            xp, w_hwio, window_strides=(1, 1), padding="VALID",
            dimension_numbers=("NHWC", "HWIO", "NHWC"),
        ) + b
    return jnp.transpose(x, (0, 3, 1, 2))


if __name__ == "__main__":
    # Small shapes consistent with the module: batch=2, channels=4, spatial=16.
    N, C, Himg, Wimg = 2, 4, 16, 16
    key = jax.random.PRNGKey(0)
    kx, kw, kb = jax.random.split(key, 3)

    x = jax.random.normal(kx, (N, C, Himg, Wimg), dtype=jnp.float32)

    # Deterministic Conv2d(C, C, 3) init (PyTorch default uniform bounds),
    # stored directly in HWIO layout: (3, 3, Cin, Cout).
    fan_in = C * 3 * 3
    bound = 1.0 / (fan_in ** 0.5)
    w_hwio = jax.random.uniform(kw, (3, 3, C, C), jnp.float32, -bound, bound)
    b = jax.random.uniform(kb, (C,), jnp.float32, -bound, bound)

    ref = _reference_forward(x, w_hwio, b, with_conv=True)

    # Multi-tile path (grid = (N, 2) row tiles, circular row halo side input).
    out = jax.block_until_ready(
        upsample_forward(x, w_hwio, b, with_conv=True, row_tile=8))
    assert out.shape == (N, C, 2 * Himg, 2 * Wimg), out.shape
    assert jnp.allclose(out, ref, rtol=1e-4, atol=1e-4), float(
        jnp.max(jnp.abs(out - ref)))

    # Auto row-tile path (single tile here, wrap handled entirely in-kernel).
    out2 = jax.block_until_ready(upsample_forward(x, w_hwio, b, with_conv=True))
    assert jnp.allclose(out2, ref, rtol=1e-4, atol=1e-4), float(
        jnp.max(jnp.abs(out2 - ref)))

    # with_conv=False path (pure nearest upsample, plain JAX).
    out3 = jax.block_until_ready(upsample_forward(x, with_conv=False))
    ref3 = _reference_forward(x, None, None, with_conv=False)
    assert jnp.allclose(out3, ref3), "nearest-only path mismatch"

    print("KERNEL_OK")
</pallas_src>

<mosaic_0001>
module attributes {stable_mosaic.version = 11 : i64} {
  func.func @_upsample_conv_kernel(%arg0: i32, %arg1: i32, %arg2: memref<1x8x16x4xf32, #tpu.memory_space<vmem>>, %arg3: memref<1x1x2x16x4xf32, #tpu.memory_space<vmem>>, %arg4: memref<36x16xf32, #tpu.memory_space<vmem>>, %arg5: memref<1x16xf32, #tpu.memory_space<vmem>>, %arg6: memref<1x8x16x16xf32, #tpu.memory_space<vmem>>) attributes {dimension_semantics = [#tpu.dimension_semantics<parallel>, #tpu.dimension_semantics<parallel>], iteration_bounds = array<i64: 2, 2>, scalar_prefetch = 0 : i64, scratch_operands = 0 : i64, tpu.core_type = #tpu.core_type<tc>, window_params = [{transform_indices = @transform_0, window_bounds = array<i64: 1, 8, 16, 4>}, {transform_indices = @transform_1, window_bounds = array<i64: 1, 1, 2, 16, 4>}, {pipeline_mode = #tpu.pipeline_mode<synchronous>, transform_indices = @transform_2, window_bounds = array<i64: 36, 16>}, {pipeline_mode = #tpu.pipeline_mode<synchronous>, transform_indices = @transform_3, window_bounds = array<i64: 1, 16>}, {transform_indices = @transform_4, window_bounds = array<i64: 1, 8, 16, 16>}]} {
    %c0 = arith.constant 0 : index
    %c0_0 = arith.constant 0 : index
    %c0_1 = arith.constant 0 : index
    %c0_2 = arith.constant 0 : index
    %0 = vector.load %arg2[%c0, %c0_0, %c0_1, %c0_2] : memref<1x8x16x4xf32, #tpu.memory_space<vmem>>, vector<1x8x16x4xf32>
    %1 = vector.shape_cast %0 : vector<1x8x16x4xf32> to vector<8x16x4xf32>
    %c0_3 = arith.constant 0 : index
    %c0_4 = arith.constant 0 : index
    %c0_5 = arith.constant 0 : index
    %c0_6 = arith.constant 0 : index
    %c0_7 = arith.constant 0 : index
    %2 = vector.load %arg3[%c0_3, %c0_4, %c0_5, %c0_6, %c0_7] : memref<1x1x2x16x4xf32, #tpu.memory_space<vmem>>, vector<1x1x2x16x4xf32>
    %3 = vector.shape_cast %2 : vector<1x1x2x16x4xf32> to vector<2x16x4xf32>
    %4 = vector.extract_strided_slice %3 {offsets = [0, 0, 0], sizes = [1, 16, 4], strides = [1, 1, 1]} : vector<2x16x4xf32> to vector<1x16x4xf32>
    %5 = vector.extract_strided_slice %3 {offsets = [1, 0, 0], sizes = [1, 16, 4], strides = [1, 1, 1]} : vector<2x16x4xf32> to vector<1x16x4xf32>
    %6 = tpu.concatenate %4, %1, %5 in 0 : vector<1x16x4xf32>, vector<8x16x4xf32>, vector<1x16x4xf32> -> vector<10x16x4xf32>
    %7 = vector.extract_strided_slice %6 {offsets = [0, 15, 0], sizes = [10, 1, 4], strides = [1, 1, 1]} : vector<10x16x4xf32> to vector<10x1x4xf32>
    %8 = vector.extract_strided_slice %6 {offsets = [0, 0, 0], sizes = [10, 15, 4], strides = [1, 1, 1]} : vector<10x16x4xf32> to vector<10x15x4xf32>
    %9 = tpu.concatenate %7, %8 in 1 : vector<10x1x4xf32>, vector<10x15x4xf32> -> vector<10x16x4xf32>
    %10 = vector.extract_strided_slice %6 {offsets = [0, 1, 0], sizes = [10, 15, 4], strides = [1, 1, 1]} : vector<10x16x4xf32> to vector<10x15x4xf32>
    %11 = vector.extract_strided_slice %6 {offsets = [0, 0, 0], sizes = [10, 1, 4], strides = [1, 1, 1]} : vector<10x16x4xf32> to vector<10x1x4xf32>
    %12 = tpu.concatenate %10, %11 in 1 : vector<10x15x4xf32>, vector<10x1x4xf32> -> vector<10x16x4xf32>
    %13 = vector.extract_strided_slice %9 {offsets = [0, 0, 0], sizes = [8, 16, 4], strides = [1, 1, 1]} : vector<10x16x4xf32> to vector<8x16x4xf32>
    %14 = vector.extract_strided_slice %6 {offsets = [0, 0, 0], sizes = [8, 16, 4], strides = [1, 1, 1]} : vector<10x16x4xf32> to vector<8x16x4xf32>
    %15 = vector.extract_strided_slice %12 {offsets = [0, 0, 0], sizes = [8, 16, 4], strides = [1, 1, 1]} : vector<10x16x4xf32> to vector<8x16x4xf32>
    %16 = vector.extract_strided_slice %9 {offsets = [1, 0, 0], sizes = [8, 16, 4], strides = [1, 1, 1]} : vector<10x16x4xf32> to vector<8x16x4xf32>
    %17 = vector.extract_strided_slice %6 {offsets = [1, 0, 0], sizes = [8, 16, 4], strides = [1, 1, 1]} : vector<10x16x4xf32> to vector<8x16x4xf32>
    %18 = vector.extract_strided_slice %12 {offsets = [1, 0, 0], sizes = [8, 16, 4], strides = [1, 1, 1]} : vector<10x16x4xf32> to vector<8x16x4xf32>
    %19 = vector.extract_strided_slice %9 {offsets = [2, 0, 0], sizes = [8, 16, 4], strides = [1, 1, 1]} : vector<10x16x4xf32> to vector<8x16x4xf32>
    %20 = vector.extract_strided_slice %6 {offsets = [2, 0, 0], sizes = [8, 16, 4], strides = [1, 1, 1]} : vector<10x16x4xf32> to vector<8x16x4xf32>
    %21 = vector.extract_strided_slice %12 {offsets = [2, 0, 0], sizes = [8, 16, 4], strides = [1, 1, 1]} : vector<10x16x4xf32> to vector<8x16x4xf32>
    %22 = tpu.concatenate %13, %14, %15, %16, %17, %18, %19, %20, %21 in 2 : vector<8x16x4xf32>, vector<8x16x4xf32>, vector<8x16x4xf32>, vector<8x16x4xf32>, vector<8x16x4xf32>, vector<8x16x4xf32>, vector<8x16x4xf32>, vector<8x16x4xf32>, vector<8x16x4xf32> -> vector<8x16x36xf32>
    %23 = vector.shape_cast %22 : vector<8x16x36xf32> to vector<128x36xf32>
    %c0_8 = arith.constant 0 : index
    %c0_9 = arith.constant 0 : index
    %24 = vector.load %arg4[%c0_8, %c0_9] : memref<36x16xf32, #tpu.memory_space<vmem>>, vector<36x16xf32>
    %cst = arith.constant dense<0.000000e+00> : vector<128x16xf32>
    %25 = tpu.matmul %23, %24, %cst {dimension_numbers = #tpu.dot_dimension_numbers<[1], [0], [0], [1], [0, 0, 1, 1], [], []>} : vector<128x36xf32>, vector<36x16xf32>, vector<128x16xf32> -> vector<128x16xf32>
    %c0_10 = arith.constant 0 : index
    %c0_11 = arith.constant 0 : index
    %26 = vector.load %arg5[%c0_10, %c0_11] : memref<1x16xf32, #tpu.memory_space<vmem>>, vector<1x16xf32>
    %27 = vector.broadcast %26 : vector<1x16xf32> to vector<128x16xf32>
    %28 = arith.addf %25, %27 : vector<128x16xf32>
    %29 = vector.shape_cast %28 : vector<128x16xf32> to vector<8x16x16xf32>
    %c0_12 = arith.constant 0 : index
    %c0_13 = arith.constant 0 : index
    %c0_14 = arith.constant 0 : index
    %c0_15 = arith.constant 0 : index
    %30 = vector.load %arg6[%c0_12, %c0_13, %c0_14, %c0_15] : memref<1x8x16x16xf32, #tpu.memory_space<vmem>>, vector<1x8x16x16xf32>
    %31 = vector.shape_cast %30 : vector<1x8x16x16xf32> to vector<8x16x16xf32>
    %32 = vector.shape_cast %29 : vector<8x16x16xf32> to vector<1x8x16x16xf32>
    tpu.vector_store %arg6[%c0_12, %c0_13, %c0_14, %c0_15], %32 {strides = array<i32>} : memref<1x8x16x16xf32, #tpu.memory_space<vmem>>, vector<1x8x16x16xf32>,
    return
  }
  func.func @transform_0(%arg0: i32, %arg1: i32) -> (i32, i32, i32, i32) {
    %c0_i32 = arith.constant 0 : i32
    %c0_i32_0 = arith.constant 0 : i32
    %c0_i32_1 = arith.constant 0 : i32
    return %arg0, %arg1, %c0_i32, %c0_i32_0 : i32, i32, i32, i32
  }
  func.func @transform_1(%arg0: i32, %arg1: i32) -> (i32, i32, i32, i32, i32) {
    %c0_i32 = arith.constant 0 : i32
    %c0_i32_0 = arith.constant 0 : i32
    %c0_i32_1 = arith.constant 0 : i32
    %c0_i32_2 = arith.constant 0 : i32
    return %arg0, %arg1, %c0_i32, %c0_i32_0, %c0_i32_1 : i32, i32, i32, i32, i32
  }
  func.func @transform_2(%arg0: i32, %arg1: i32) -> (i32, i32) {
    %c0_i32 = arith.constant 0 : i32
    %c0_i32_0 = arith.constant 0 : i32
    %c0_i32_1 = arith.constant 0 : i32
    return %c0_i32, %c0_i32_0 : i32, i32
  }
  func.func @transform_3(%arg0: i32, %arg1: i32) -> (i32, i32) {
    %c0_i32 = arith.constant 0 : i32
    %c0_i32_0 = arith.constant 0 : i32
    %c0_i32_1 = arith.constant 0 : i32
    return %c0_i32, %c0_i32_0 : i32, i32
  }
  func.func @transform_4(%arg0: i32, %arg1: i32) -> (i32, i32, i32, i32) {
    %c0_i32 = arith.constant 0 : i32
    %c0_i32_0 = arith.constant 0 : i32
    %c0_i32_1 = arith.constant 0 : i32
    return %arg0, %arg1, %c0_i32, %c0_i32_0 : i32, i32, i32, i32
  }
}

</mosaic_0001>

<llo_original>
// kernel: tpu_custom_call.1
$region0: #{tpu_custom_call.1}
  #allocation0 [shape = 'u32[]', space=smem, size = 0x4, offset = 0x4, fixed_abs, tag = 'smem constant byte address 0x4 - core index']
  #allocation1 [shape = 'u32[144,128]{1,0:T(1,128)}', space=vmem, size = 0x12000, scoped, tag = 'internal scratch']
  %s0 = inlined_call_operand.vmem [shape: f32[2,16,16,4], index: 0, kind: input, shape index: {}]
  %s1 = inlined_call_operand.vmem [shape: f32[2,2,2,16,4], index: 1, kind: input, shape index: {}]
  %s2 = inlined_call_operand.vmem [shape: f32[36,16], index: 2, kind: input, shape index: {}]
  %s3 = inlined_call_operand.vmem [shape: f32[1,16], index: 3, kind: input, shape index: {}]
  %s4 = inlined_call_operand.hbm [shape: f32[2,16,16,16], index: 4, kind: output, shape index: {}]
  %s5 = sld [smem:[#allocation0]]
  $region49: #{tpu_custom_call.1} parent=0
    _
  %s7 = ssub.s32 1, %s5
  %s8 = scalar_select 0, %s7, %s5
  $region1: #{tpu_custom_call.1} parent=0
    #allocation2 [shape = 'u8[131072]{0}', space=vmem, size = 0x20000, scoped, tag = 'output window, operand 0']
    #allocation3 [shape = 's32[2]{0}', space=sflag, size = 0x8, scoped, tag = 'scoped memory for tpu_custom_call.1']
    %9 = vsyncpa [#allocation3], 0
    %s10 = scalar_lea.sflag [#allocation3], 1
    %11 = vsyncpa %s10, 0
    loop: start=0, step=1, limit=6
    $region2: #{tpu_custom_call.1} parent=1 // loop_pre_header
      _
    $region3: #{tpu_custom_call.1} parent=1 // loop_header
      %s13 = sphi 0, %s17
      %p14 = scmp.ge.s32.totalorder %s13, 6
      %s20 = sphi 0, %s32
      %s21 = sphi 0, %s28
      %s22 = sphi 0, %s20
      %s23 = sphi 0, %s21
      %s24 = sphi 0, %s22
      %s25 = sphi 0, %s23
      %s37 = sphi 0, %s39
      %s40 = sphi 0, %s37
      %s41 = sphi 0, %s40
      %s57 = sphi 0, %s41
      %s65 = sphi 0, %s67
      %s68 = sphi 0, %s65
      %s69 = sphi 0, %s68
      %s85 = sphi 0, %s69
      %s89 = sphi 0, %s89
      %s91 = sphi 0, %s89
      %s92 = sphi 0, %s91
      %s106 = sphi 0, %s92
      %s110 = sphi 0, %s110
      %s112 = sphi 0, %s110
      %s113 = sphi 0, %s112
      %s127 = sphi 0, %s113
      %s135 = sphi 0, %s137
      %s138 = sphi 0, %s135
      %s139 = sphi 0, %s138
      %s155 = sphi 0, %s139
    $region4: #{tpu_custom_call.1} parent=1 // loop_header_branch
      %16 = sbr.rel (%p14) target = $region8
    $region5: #{tpu_custom_call.1} parent=1 // loop_body
      %s18 = ssub.s32 %s13, 1
      %s19 = ssub.s32 %s13, 2
      %s26 = sadd.s32 1, %s21
      %p27 = scmp.ge.s32.totalorder %s26, 2
      %s28 = scalar_select %p27, 0, %s26
      %s29 = sadd.s32 1, %s20
      %s30 = scalar_select %p27, %s29, %s20
      %p31 = scmp.ge.s32.totalorder %s30, 2
      %s32 = scalar_select %p31, 0, %s30
      %s33 = ssub.s32 %s20, %s32
      %s34 = ssub.s32 %s21, %s28
      %s35 = sor.u32 %s33, %s34
      %p36 = scmp.eq.s32.totalorder %s35, 0
      %s38 = sadd.s32 %s37, 1
      %s39 = scalar_select %p36, %s37, %s38
      %p42 = pneg %p36
      %p43 = scmp.eq.s32.totalorder %s13, 3
      %p44 = por %p42, %p43
      %p45 = scmp.ne.s32.totalorder %s37, %s40
      %p46 = scmp.eq.s32.totalorder %s13, 0
      %p47 = por %p45, %p46
      %p48 = scmp.ne.s32.totalorder %s37, %s40
      %p49 = scmp.eq.s32.totalorder %s18, 3
      %p50 = por %p48, %p49
      %p51 = scmp.ne.s32.totalorder %s40, %s41
      %p52 = scmp.eq.s32.totalorder %s18, 0
      %p53 = por %p51, %p52
      %p54 = scmp.ne.s32.totalorder %s40, %s41
      %p55 = scmp.eq.s32.totalorder %s19, 3
      %p56 = por %p54, %p55
      %p58 = scmp.ne.s32.totalorder %s41, %s57
      %p59 = scmp.eq.s32.totalorder %s19, 0
      %p60 = por %p58, %p59
      %s61 = ssub.s32 %s20, %s32
      %s62 = ssub.s32 %s21, %s28
      %s63 = sor.u32 %s61, %s62
      %p64 = scmp.eq.s32.totalorder %s63, 0
      %s66 = sadd.s32 %s65, 1
      %s67 = scalar_select %p64, %s65, %s66
      %p70 = pneg %p64
      %p71 = scmp.eq.s32.totalorder %s13, 3
      %p72 = por %p70, %p71
      %p73 = scmp.ne.s32.totalorder %s65, %s68
      %p74 = scmp.eq.s32.totalorder %s13, 0
      %p75 = por %p73, %p74
      %p76 = scmp.ne.s32.totalorder %s65, %s68
      %p77 = scmp.eq.s32.totalorder %s18, 3
      %p78 = por %p76, %p77
      %p79 = scmp.ne.s32.totalorder %s68, %s69
      %p80 = scmp.eq.s32.totalorder %s18, 0
      %p81 = por %p79, %p80
      %p82 = scmp.ne.s32.totalorder %s68, %s69
      %p83 = scmp.eq.s32.totalorder %s19, 3
      %p84 = por %p82, %p83
      %p86 = scmp.ne.s32.totalorder %s69, %s85
      %p87 = scmp.eq.s32.totalorder %s19, 0
      %p88 = por %p86, %p87
      %s90 = sadd.s32 %s89, 1
      %p93 = scmp.eq.s32.totalorder %s13, 3
      %p94 = scmp.ne.s32.totalorder %s89, %s91
      %p95 = scmp.eq.s32.totalorder %s13, 0
      %p96 = por %p94, %p95
      %p97 = scmp.ne.s32.totalorder %s89, %s91
      %p98 = scmp.eq.s32.totalorder %s18, 3
      %p99 = por %p97, %p98
      %p100 = scmp.ne.s32.totalorder %s91, %s92
      %p101 = scmp.eq.s32.totalorder %s18, 0
      %p102 = por %p100, %p101
      %p103 = scmp.ne.s32.totalorder %s91, %s92
      %p104 = scmp.eq.s32.totalorder %s19, 3
      %p105 = por %p103, %p104
      %p107 = scmp.ne.s32.totalorder %s92, %s106
      %p108 = scmp.eq.s32.totalorder %s19, 0
      %p109 = por %p107, %p108
      %s111 = sadd.s32 %s110, 1
      %p114 = scmp.eq.s32.totalorder %s13, 3
      %p115 = scmp.ne.s32.totalorder %s110, %s112
      %p116 = scmp.eq.s32.totalorder %s13, 0
      %p117 = por %p115, %p116
      %p118 = scmp.ne.s32.totalorder %s110, %s112
      %p119 = scmp.eq.s32.totalorder %s18, 3
      %p120 = por %p118, %p119
      %p121 = scmp.ne.s32.totalorder %s112, %s113
      %p122 = scmp.eq.s32.totalorder %s18, 0
      %p123 = por %p121, %p122
      %p124 = scmp.ne.s32.totalorder %s112, %s113
      %p125 = scmp.eq.s32.totalorder %s19, 3
      %p126 = por %p124, %p125
      %p128 = scmp.ne.s32.totalorder %s113, %s127
      %p129 = scmp.eq.s32.totalorder %s19, 0
      %p130 = por %p128, %p129
      %s131 = ssub.s32 %s20, %s32
      %s132 = ssub.s32 %s21, %s28
      %s133 = sor.u32 %s131, %s132
      %p134 = scmp.eq.s32.totalorder %s133, 0
      %s136 = sadd.s32 %s135, 1
      %s137 = scalar_select %p134, %s135, %s136
      %p140 = pneg %p134
      %p141 = scmp.eq.s32.totalorder %s13, 3
      %p142 = por %p140, %p141
      %p143 = scmp.ne.s32.totalorder %s135, %s138
      %p144 = scmp.eq.s32.totalorder %s13, 0
      %p145 = por %p143, %p144
      %p146 = scmp.ne.s32.totalorder %s135, %s138
      %p147 = scmp.eq.s32.totalorder %s18, 3
      %p148 = por %p146, %p147
      %p149 = scmp.ne.s32.totalorder %s138, %s139
      %p150 = scmp.eq.s32.totalorder %s18, 0
      %p151 = por %p149, %p150
      %p152 = scmp.ne.s32.totalorder %s138, %s139
      %p153 = scmp.eq.s32.totalorder %s19, 3
      %p154 = por %p152, %p153
      %p156 = scmp.ne.s32.totalorder %s139, %s155
      %p157 = scmp.eq.s32.totalorder %s19, 0
      %p158 = por %p156, %p157
      %p159 = scmp.le.s32.totalorder 1, %s13
      %p160 = scmp.lt.s32.totalorder %s13, 5
      %p161 = pnand %p159, %p160
      %p162 = pneg %p161
      // Predicated region
      $region9: #{tpu_custom_call.1} parent=5 // pred_check
        _
      $region10: #{tpu_custom_call.1} parent=5 // pred_check_branch
        %164 = sbr.rel (%p161) target = $region12
      $region11: #{tpu_custom_call.1} parent=5 // pred_region
        %s165 = ssub.s32 %s13, 1
        // Predicated region
        $region13: #{tpu_custom_call.1} parent=11 // pred_check
          %p166 = pneg %p102
        $region14: #{tpu_custom_call.1} parent=11 // pred_check_branch
          %168 = sbr.rel (%p166) target = $region16
        $region15: #{tpu_custom_call.1} parent=11 // pred_region
          _
        $region16: #{tpu_custom_call.1} parent=11 // pred_fallthru
          _
        // Predicated region
        $region17: #{tpu_custom_call.1} parent=11 // pred_check
          %p169 = pneg %p123
        $region18: #{tpu_custom_call.1} parent=11 // pred_check_branch
          %171 = sbr.rel (%p169) target = $region20
        $region19: #{tpu_custom_call.1} parent=11 // pred_region
          _
        $region20: #{tpu_custom_call.1} parent=11 // pred_fallthru
          _
      $region12: #{tpu_custom_call.1} parent=5 // pred_fallthru
        _
      %p172 = scmp.lt.s32.totalorder %s13, 4
      // Predicated region
      $region21: #{tpu_custom_call.1} parent=5 // pred_check
        %p173 = pneg %p172
      $region22: #{tpu_custom_call.1} parent=5 // pred_check_branch
        %175 = sbr.rel (%p173) target = $region24
      $region23: #{tpu_custom_call.1} parent=5 // pred_region
        // Predicated region
        $region25: #{tpu_custom_call.1} parent=23 // pred_check
          %p176 = pneg %p47
        $region26: #{tpu_custom_call.1} parent=23 // pred_check_branch
          %178 = sbr.rel (%p176) target = $region28
        $region27: #{tpu_custom_call.1} parent=23 // pred_region
          %s179 = smul.u32 8, %s21
          %p180 = scmp.lt.s32.totalorder %s20, 1
          %s181 = scalar_select %p180, %s20, 1
          %p182 = scmp.lt.s32.totalorder %s179, 15
          %s183 = scalar_select %p182, %s179, 15
          %s184 = smul.addr %s183, 2
          %s185 = smul.addr %s181, 32
          %s186 = sadd.s32 %s184, %s185
          %s187 = smul.addr %s186, 8
          %s188 = scalar_lea.vmem %s0, %s187
          %s189 = smul.u32 8, %s21
        $region28: #{tpu_custom_call.1} parent=23 // pred_fallthru
          _
        // Predicated region
        $region29: #{tpu_custom_call.1} parent=23 // pred_check
          %p190 = pneg %p75
        $region30: #{tpu_custom_call.1} parent=23 // pred_check_branch
          %192 = sbr.rel (%p190) target = $region32
        $region31: #{tpu_custom_call.1} parent=23 // pred_region
          %p193 = scmp.lt.s32.totalorder %s20, 1
          %s194 = scalar_select %p193, %s20, 1
          %p195 = scmp.lt.s32.totalorder %s21, 1
          %s196 = scalar_select %p195, %s21, 1
          %s197 = smul.addr %s196, 4
          %s198 = smul.addr %s194, 8
          %s199 = sadd.s32 %s197, %s198
          %s200 = smul.addr %s199, 8
          %s201 = scalar_lea.vmem %s1, %s200
        $region32: #{tpu_custom_call.1} parent=23 // pred_fallthru
          _
      $region24: #{tpu_custom_call.1} parent=5 // pred_fallthru
        _
      %p202 = scmp.le.s32.totalorder 1, %s13
      %p203 = scmp.lt.s32.totalorder %s13, 5
      %p204 = pnand %p202, %p203
      %p205 = pneg %p204
      // Predicated region
      $region33: #{tpu_custom_call.1} parent=5 // pred_check
        _
      $region34: #{tpu_custom_call.1} parent=5 // pred_check_branch
        %207 = sbr.rel (%p204) target = $region36
      $region35: #{tpu_custom_call.1} parent=5 // pred_region
        %s208 = ssub.s32 %s13, 1
        %s209 = smul.u32 8, %s23
        %p210 = scmp.lt.s32.totalorder %s22, 1
        %s211 = scalar_select %p210, %s22, 1
        %p212 = scmp.lt.s32.totalorder %s209, 15
        %s213 = scalar_select %p212, %s209, 15
        %s214 = smul.addr %s213, 2
        %s215 = smul.addr %s211, 32
        %s216 = sadd.s32 %s214, %s215
        %s217 = smul.addr %s216, 8
        %s218 = scalar_lea.vmem %s0, %s217
        %p219 = pneg %p53
        %p220 = pneg %p50
        %p221 = scmp.lt.s32.totalorder %s22, 1
        %s222 = scalar_select %p221, %s22, 1
        %p223 = scmp.lt.s32.totalorder %s23, 1
        %s224 = scalar_select %p223, %s23, 1
        %s225 = smul.addr %s224, 4
        %s226 = smul.addr %s222, 8
        %s227 = sadd.s32 %s225, %s226
        %s228 = smul.addr %s227, 8
        %s229 = scalar_lea.vmem %s1, %s228
        %p230 = pneg %p81
        %p231 = pneg %p78
        %p232 = pneg %p102
        %p233 = pneg %p99
        %p234 = pneg %p123
        %p235 = pneg %p120
        %p236 = pneg %p151
        %p237 = pneg %p148
        %s238 = sand.u32 %s138, 1
        %s239 = scalar_lea.sflag [#allocation3], %s238
        %s240 = sand.u32 %s138, 1
        %s241 = smul.addr %s240, 128
        %s242 = scalar_lea.vmem [#allocation2], %s241
        %s243 = smul.u32 8, %s23
        %p244 = scmp.lt.s32.totalorder %s22, 1
        %s245 = scalar_select %p244, %s22, 1
        %p246 = scmp.lt.s32.totalorder %s243, 15
        %s247 = scalar_select %p246, %s243, 15
        %s248 = smul.addr %s247, 2
        %s249 = smul.addr %s245, 32
        %s250 = sadd.s32 %s248, %s249
        %s251 = smul.addr %s250, 8
        %s252 = scalar_lea.vmem %s0, %s251
        %s253 = smul.u32 8, %s23
        %p254 = scmp.lt.s32.totalorder %s22, 1
        %s255 = scalar_select %p254, %s22, 1
        %p256 = scmp.lt.s32.totalorder %s23, 1
        %s257 = scalar_select %p256, %s23, 1
        %s258 = smul.addr %s257, 4
        %s259 = smul.addr %s255, 8
        %s260 = sadd.s32 %s258, %s259
        %s261 = smul.addr %s260, 8
        %s262 = scalar_lea.vmem %s1, %s261
        %s263 = smul.u32 8, %s23
        %v264 = vld [vmem:[%s252] sm:$0xff]
        %v265 = vld [vmem:[%s252 + $0x8] sm:$0xff]
        %v266 = vld [vmem:[%s252 + $0x10] sm:$0xff]
        %v267 = vld [vmem:[%s252 + $0x18] sm:$0xff]
        %v268 = vld [vmem:[%s252 + $0x20] sm:$0xff]
        %v269 = vld [vmem:[%s252 + $0x28] sm:$0xff]
        %v270 = vld [vmem:[%s252 + $0x30] sm:$0xff]
        %v271 = vld [vmem:[%s252 + $0x38] sm:$0xff]
        %v272 = vld [vmem:[%s252 + $0x40] sm:$0xff]
        %v273 = vld [vmem:[%s252 + $0x48] sm:$0xff]
        %v274 = vld [vmem:[%s252 + $0x50] sm:$0xff]
        %v275 = vld [vmem:[%s252 + $0x58] sm:$0xff]
        %v276 = vld [vmem:[%s252 + $0x60] sm:$0xff]
        %v277 = vld [vmem:[%s252 + $0x68] sm:$0xff]
        %v278 = vld [vmem:[%s252 + $0x70] sm:$0xff]
        %v279 = vld [vmem:[%s252 + $0x78] sm:$0xff]
        %v280 = vld [vmem:[%s262] sm:$0xff]
        %v281 = vld [vmem:[%s262 + $0x8] sm:$0xff]
        %v282 = vld [vmem:[%s262 + $0x10] sm:$0xff]
        %v283 = vld [vmem:[%s262 + $0x18] sm:$0xff]
        %v294 = vrot.slane %v281, 7
        %v295 = vrot.slane %v265, 7
        %v296 = vrot.slane %v267, 7
        %v297 = vrot.slane %v269, 7
        %v298 = vrot.slane %v271, 7
        %v299 = vrot.slane %v273, 7
        %v300 = vrot.slane %v275, 7
        %v301 = vrot.slane %v277, 7
        %v302 = vrot.slane %v279, 7
        %v303 = vrot.slane %v283, 7
        %vm324 = vcmask 1040384
        %v325 = vrot.slane %v280, 7
        %v326 = vsel %vm324, %v325, %v294
        %v327 = vrot.slane %v264, 7
        %v328 = vsel %vm324, %v327, %v295
        %v329 = vrot.slane %v266, 7
        %v330 = vsel %vm324, %v329, %v296
        %v331 = vrot.slane %v268, 7
        %v332 = vsel %vm324, %v331, %v297
        %v333 = vrot.slane %v270, 7
        %v334 = vsel %vm324, %v333, %v298
        %v335 = vrot.slane %v272, 7
        %v336 = vsel %vm324, %v335, %v299
        %v337 = vrot.slane %v274, 7
        %v338 = vsel %vm324, %v337, %v300
        %v339 = vrot.slane %v276, 7
        %v340 = vsel %vm324, %v339, %v301
        %v341 = vrot.slane %v278, 7
        %v342 = vsel %vm324, %v341, %v302
        %v343 = vrot.slane %v282, 7
        %v344 = vsel %vm324, %v343, %v303
        %v363 = vsel %vm324, %v294, %v325
        %v364 = vsel %vm324, %v295, %v327
        %v365 = vsel %vm324, %v296, %v329
        %v366 = vsel %vm324, %v297, %v331
        %v367 = vsel %vm324, %v298, %v333
        %v368 = vsel %vm324, %v299, %v335
        %v369 = vsel %vm324, %v300, %v337
        %v370 = vsel %vm324, %v301, %v339
        %v371 = vsel %vm324, %v302, %v341
        %v372 = vsel %vm324, %v303, %v343
        %vm373 = vcmask 1046528
        %v374 = vrot.slane %v280, 1
        %v375 = vrot.slane %v281, 1
        %v376 = vsel %vm373, %v374, %v375
        %v377 = vrot.slane %v264, 1
        %v378 = vrot.slane %v265, 1
        %v379 = vsel %vm373, %v377, %v378
        %v380 = vrot.slane %v266, 1
        %v381 = vrot.slane %v267, 1
        %v382 = vsel %vm373, %v380, %v381
        %v383 = vrot.slane %v268, 1
        %v384 = vrot.slane %v269, 1
        %v385 = vsel %vm373, %v383, %v384
        %v386 = vrot.slane %v270, 1
        %v387 = vrot.slane %v271, 1
        %v388 = vsel %vm373, %v386, %v387
        %v389 = vrot.slane %v272, 1
        %v390 = vrot.slane %v273, 1
        %v391 = vsel %vm373, %v389, %v390
        %v392 = vrot.slane %v274, 1
        %v393 = vrot.slane %v275, 1
        %v394 = vsel %vm373, %v392, %v393
        %v395 = vrot.slane %v276, 1
        %v396 = vrot.slane %v277, 1
        %v397 = vsel %vm373, %v395, %v396
        %v398 = vrot.slane %v278, 1
        %v399 = vrot.slane %v279, 1
        %v400 = vsel %vm373, %v398, %v399
        %v401 = vrot.slane %v282, 1
        %v402 = vrot.slane %v283, 1
        %v403 = vsel %vm373, %v401, %v402
        %v424 = vsel %vm373, %v375, %v374
        %v425 = vsel %vm373, %v378, %v377
        %v426 = vsel %vm373, %v381, %v380
        %v427 = vsel %vm373, %v384, %v383
        %v428 = vsel %vm373, %v387, %v386
        %v429 = vsel %vm373, %v390, %v389
        %v430 = vsel %vm373, %v393, %v392
        %v431 = vsel %vm373, %v396, %v395
        %v432 = vsel %vm373, %v399, %v398
        %v433 = vsel %vm373, %v402, %v401
        %434 = vrot.lane.b32.xlu0 %v280, 4
        %v435 = vpop.permute.xlu0 %434
        %436 = vrot.lane.b32.xlu0 %v281, 4
        %v437 = vpop.permute.xlu0 %436
        %438 = vrot.lane.b32.xlu0 %v264, 4
        %v439 = vpop.permute.xlu0 %438
        %440 = vrot.lane.b32.xlu0 %v265, 4
        %v441 = vpop.permute.xlu0 %440
        %442 = vrot.lane.b32.xlu0 %v266, 4
        %v443 = vpop.permute.xlu0 %442
        %444 = vrot.lane.b32.xlu0 %v267, 4
        %v445 = vpop.permute.xlu0 %444
        %446 = vrot.lane.b32.xlu0 %v268, 4
        %v447 = vpop.permute.xlu0 %446
        %448 = vrot.lane.b32.xlu0 %v269, 4
        %v449 = vpop.permute.xlu0 %448
        %450 = vrot.lane.b32.xlu0 %v270, 4
        %v451 = vpop.permute.xlu0 %450
        %452 = vrot.lane.b32.xlu0 %v271, 4
        %v453 = vpop.permute.xlu0 %452
        %454 = vrot.lane.b32.xlu0 %v272, 4
        %v455 = vpop.permute.xlu0 %454
        %456 = vrot.lane.b32.xlu0 %v273, 4
        %v457 = vpop.permute.xlu0 %456
        %458 = vrot.lane.b32.xlu0 %v274, 4
        %v459 = vpop.permute.xlu0 %458
        %460 = vrot.lane.b32.xlu0 %v275, 4
        %v461 = vpop.permute.xlu0 %460
        %462 = vrot.lane.b32.xlu0 %v276, 4
        %v463 = vpop.permute.xlu0 %462
        %464 = vrot.lane.b32.xlu0 %v277, 4
        %v465 = vpop.permute.xlu0 %464
        %490 = vrot.lane.b32.xlu0 %v376, 8
        %v491 = vpop.permute.xlu0 %490
        %492 = vrot.lane.b32.xlu0 %v424, 8
        %v493 = vpop.permute.xlu0 %492
        %494 = vrot.lane.b32.xlu0 %v379, 8
        %v495 = vpop.permute.xlu0 %494
        %496 = vrot.lane.b32.xlu0 %v425, 8
        %v497 = vpop.permute.xlu0 %496
        %498 = vrot.lane.b32.xlu0 %v382, 8
        %v499 = vpop.permute.xlu0 %498
        %500 = vrot.lane.b32.xlu0 %v426, 8
        %v501 = vpop.permute.xlu0 %500
        %502 = vrot.lane.b32.xlu0 %v385, 8
        %v503 = vpop.permute.xlu0 %502
        %504 = vrot.lane.b32.xlu0 %v427, 8
        %v505 = vpop.permute.xlu0 %504
        %506 = vrot.lane.b32.xlu0 %v388, 8
        %v507 = vpop.permute.xlu0 %506
        %508 = vrot.lane.b32.xlu0 %v428, 8
        %v509 = vpop.permute.xlu0 %508
        %510 = vrot.lane.b32.xlu0 %v391, 8
        %v511 = vpop.permute.xlu0 %510
        %512 = vrot.lane.b32.xlu0 %v429, 8
        %v513 = vpop.permute.xlu0 %512
        %514 = vrot.lane.b32.xlu0 %v394, 8
        %v515 = vpop.permute.xlu0 %514
        %516 = vrot.lane.b32.xlu0 %v430, 8
        %v517 = vpop.permute.xlu0 %516
        %518 = vrot.lane.b32.xlu0 %v397, 8
        %v519 = vpop.permute.xlu0 %518
        %520 = vrot.lane.b32.xlu0 %v431, 8
        %v521 = vpop.permute.xlu0 %520
        %546 = vrot.lane.b32.xlu0 %v364, 12
        %v547 = vpop.permute.xlu0 %546
        %548 = vrot.lane.b32.xlu0 %v328, 12
        %v549 = vpop.permute.xlu0 %548
        %550 = vrot.lane.b32.xlu0 %v365, 12
        %v551 = vpop.permute.xlu0 %550
        %552 = vrot.lane.b32.xlu0 %v330, 12
        %v553 = vpop.permute.xlu0 %552
        %554 = vrot.lane.b32.xlu0 %v366, 12
        %v555 = vpop.permute.xlu0 %554
        %556 = vrot.lane.b32.xlu0 %v332, 12
        %v557 = vpop.permute.xlu0 %556
        %558 = vrot.lane.b32.xlu0 %v367, 12
        %v559 = vpop.permute.xlu0 %558
        %560 = vrot.lane.b32.xlu0 %v334, 12
        %v561 = vpop.permute.xlu0 %560
        %562 = vrot.lane.b32.xlu0 %v368, 12
        %v563 = vpop.permute.xlu0 %562
        %564 = vrot.lane.b32.xlu0 %v336, 12
        %v565 = vpop.permute.xlu0 %564
        %566 = vrot.lane.b32.xlu0 %v369, 12
        %v567 = vpop.permute.xlu0 %566
        %568 = vrot.lane.b32.xlu0 %v338, 12
        %v569 = vpop.permute.xlu0 %568
        %570 = vrot.lane.b32.xlu0 %v370, 12
        %v571 = vpop.permute.xlu0 %570
        %572 = vrot.lane.b32.xlu0 %v340, 12
        %v573 = vpop.permute.xlu0 %572
        %574 = vrot.lane.b32.xlu0 %v371, 12
        %v575 = vpop.permute.xlu0 %574
        %576 = vrot.lane.b32.xlu0 %v342, 12
        %v577 = vpop.permute.xlu0 %576
        %594 = vrot.lane.b32.xlu0 %v264, 16
        %v595 = vpop.permute.xlu0 %594
        %596 = vrot.lane.b32.xlu0 %v265, 16
        %v597 = vpop.permute.xlu0 %596
        %598 = vrot.lane.b32.xlu0 %v266, 16
        %v599 = vpop.permute.xlu0 %598
        %600 = vrot.lane.b32.xlu0 %v267, 16
        %v601 = vpop.permute.xlu0 %600
        %602 = vrot.lane.b32.xlu0 %v268, 16
        %v603 = vpop.permute.xlu0 %602
        %604 = vrot.lane.b32.xlu0 %v269, 16
        %v605 = vpop.permute.xlu0 %604
        %606 = vrot.lane.b32.xlu0 %v270, 16
        %v607 = vpop.permute.xlu0 %606
        %608 = vrot.lane.b32.xlu0 %v271, 16
        %v609 = vpop.permute.xlu0 %608
        %610 = vrot.lane.b32.xlu0 %v272, 16
        %v611 = vpop.permute.xlu0 %610
        %612 = vrot.lane.b32.xlu0 %v273, 16
        %v613 = vpop.permute.xlu0 %612
        %614 = vrot.lane.b32.xlu0 %v274, 16
        %v615 = vpop.permute.xlu0 %614
        %616 = vrot.lane.b32.xlu0 %v275, 16
        %v617 = vpop.permute.xlu0 %616
        %618 = vrot.lane.b32.xlu0 %v276, 16
        %v619 = vpop.permute.xlu0 %618
        %620 = vrot.lane.b32.xlu0 %v277, 16
        %v621 = vpop.permute.xlu0 %620
        %622 = vrot.lane.b32.xlu0 %v278, 16
        %v623 = vpop.permute.xlu0 %622
        %624 = vrot.lane.b32.xlu0 %v279, 16
        %v625 = vpop.permute.xlu0 %624
        %643 = vrot.lane.b32.xlu0 %v379, 20
        %v644 = vpop.permute.xlu0 %643
        %645 = vrot.lane.b32.xlu0 %v425, 20
        %v646 = vpop.permute.xlu0 %645
        %647 = vrot.lane.b32.xlu0 %v382, 20
        %v648 = vpop.permute.xlu0 %647
        %649 = vrot.lane.b32.xlu0 %v426, 20
        %v650 = vpop.permute.xlu0 %649
        %651 = vrot.lane.b32.xlu0 %v385, 20
        %v652 = vpop.permute.xlu0 %651
        %653 = vrot.lane.b32.xlu0 %v427, 20
        %v654 = vpop.permute.xlu0 %653
        %655 = vrot.lane.b32.xlu0 %v388, 20
        %v656 = vpop.permute.xlu0 %655
        %657 = vrot.lane.b32.xlu0 %v428, 20
        %v658 = vpop.permute.xlu0 %657
        %659 = vrot.lane.b32.xlu0 %v391, 20
        %v660 = vpop.permute.xlu0 %659
        %661 = vrot.lane.b32.xlu0 %v429, 20
        %v662 = vpop.permute.xlu0 %661
        %663 = vrot.lane.b32.xlu0 %v394, 20
        %v664 = vpop.permute.xlu0 %663
        %665 = vrot.lane.b32.xlu0 %v430, 20
        %v666 = vpop.permute.xlu0 %665
        %667 = vrot.lane.b32.xlu0 %v397, 20
        %v668 = vpop.permute.xlu0 %667
        %669 = vrot.lane.b32.xlu0 %v431, 20
        %v670 = vpop.permute.xlu0 %669
        %671 = vrot.lane.b32.xlu0 %v400, 20
        %v672 = vpop.permute.xlu0 %671
        %673 = vrot.lane.b32.xlu0 %v432, 20
        %v674 = vpop.permute.xlu0 %673
        %692 = vrot.lane.b32.xlu0 %v365, 24
        %v693 = vpop.permute.xlu0 %692
        %694 = vrot.lane.b32.xlu0 %v330, 24
        %v695 = vpop.permute.xlu0 %694
        %696 = vrot.lane.b32.xlu0 %v366, 24
        %v697 = vpop.permute.xlu0 %696
        %698 = vrot.lane.b32.xlu0 %v332, 24
        %v699 = vpop.permute.xlu0 %698
        %700 = vrot.lane.b32.xlu0 %v367, 24
        %v701 = vpop.permute.xlu0 %700
        %702 = vrot.lane.b32.xlu0 %v334, 24
        %v703 = vpop.permute.xlu0 %702
        %704 = vrot.lane.b32.xlu0 %v368, 24
        %v705 = vpop.permute.xlu0 %704
        %706 = vrot.lane.b32.xlu0 %v336, 24
        %v707 = vpop.permute.xlu0 %706
        %708 = vrot.lane.b32.xlu0 %v369, 24
        %v709 = vpop.permute.xlu0 %708
        %710 = vrot.lane.b32.xlu0 %v338, 24
        %v711 = vpop.permute.xlu0 %710
        %712 = vrot.lane.b32.xlu0 %v370, 24
        %v713 = vpop.permute.xlu0 %712
        %714 = vrot.lane.b32.xlu0 %v340, 24
        %v715 = vpop.permute.xlu0 %714
        %716 = vrot.lane.b32.xlu0 %v371, 24
        %v717 = vpop.permute.xlu0 %716
        %718 = vrot.lane.b32.xlu0 %v342, 24
        %v719 = vpop.permute.xlu0 %718
        %720 = vrot.lane.b32.xlu0 %v372, 24
        %v721 = vpop.permute.xlu0 %720
        %722 = vrot.lane.b32.xlu0 %v344, 24
        %v723 = vpop.permute.xlu0 %722
        %740 = vrot.lane.b32.xlu0 %v266, 28
        %v741 = vpop.permute.xlu0 %740
        %742 = vrot.lane.b32.xlu0 %v267, 28
        %v743 = vpop.permute.xlu0 %742
        %744 = vrot.lane.b32.xlu0 %v268, 28
        %v745 = vpop.permute.xlu0 %744
        %746 = vrot.lane.b32.xlu0 %v269, 28
        %v747 = vpop.permute.xlu0 %746
        %748 = vrot.lane.b32.xlu0 %v270, 28
        %v749 = vpop.permute.xlu0 %748
        %750 = vrot.lane.b32.xlu0 %v271, 28
        %v751 = vpop.permute.xlu0 %750
        %752 = vrot.lane.b32.xlu0 %v272, 28
        %v753 = vpop.permute.xlu0 %752
        %754 = vrot.lane.b32.xlu0 %v273, 28
        %v755 = vpop.permute.xlu0 %754
        %756 = vrot.lane.b32.xlu0 %v274, 28
        %v757 = vpop.permute.xlu0 %756
        %758 = vrot.lane.b32.xlu0 %v275, 28
        %v759 = vpop.permute.xlu0 %758
        %760 = vrot.lane.b32.xlu0 %v276, 28
        %v761 = vpop.permute.xlu0 %760
        %762 = vrot.lane.b32.xlu0 %v277, 28
        %v763 = vpop.permute.xlu0 %762
        %764 = vrot.lane.b32.xlu0 %v278, 28
        %v765 = vpop.permute.xlu0 %764
        %766 = vrot.lane.b32.xlu0 %v279, 28
        %v767 = vpop.permute.xlu0 %766
        %768 = vrot.lane.b32.xlu0 %v282, 28
        %v769 = vpop.permute.xlu0 %768
        %770 = vrot.lane.b32.xlu0 %v283, 28
        %v771 = vpop.permute.xlu0 %770
        %789 = vrot.lane.b32.xlu0 %v382, 32
        %v790 = vpop.permute.xlu0 %789
        %791 = vrot.lane.b32.xlu0 %v426, 32
        %v792 = vpop.permute.xlu0 %791
        %793 = vrot.lane.b32.xlu0 %v385, 32
        %v794 = vpop.permute.xlu0 %793
        %795 = vrot.lane.b32.xlu0 %v427, 32
        %v796 = vpop.permute.xlu0 %795
        %797 = vrot.lane.b32.xlu0 %v388, 32
        %v798 = vpop.permute.xlu0 %797
        %799 = vrot.lane.b32.xlu0 %v428, 32
        %v800 = vpop.permute.xlu0 %799
        %801 = vrot.lane.b32.xlu0 %v391, 32
        %v802 = vpop.permute.xlu0 %801
        %803 = vrot.lane.b32.xlu0 %v429, 32
        %v804 = vpop.permute.xlu0 %803
        %805 = vrot.lane.b32.xlu0 %v394, 32
        %v806 = vpop.permute.xlu0 %805
        %807 = vrot.lane.b32.xlu0 %v430, 32
        %v808 = vpop.permute.xlu0 %807
        %809 = vrot.lane.b32.xlu0 %v397, 32
        %v810 = vpop.permute.xlu0 %809
        %811 = vrot.lane.b32.xlu0 %v431, 32
        %v812 = vpop.permute.xlu0 %811
        %813 = vrot.lane.b32.xlu0 %v400, 32
        %v814 = vpop.permute.xlu0 %813
        %815 = vrot.lane.b32.xlu0 %v432, 32
        %v816 = vpop.permute.xlu0 %815
        %817 = vrot.lane.b32.xlu0 %v403, 32
        %v818 = vpop.permute.xlu0 %817
        %819 = vrot.lane.b32.xlu0 %v433, 32
        %v820 = vpop.permute.xlu0 %819
        %vm837 = vcmask 31744
        %v838 = vsel %vm837, %v363, %v435
        %v839 = vsel %vm837, %v326, %v437
        %v840 = vsel %vm837, %v364, %v439
        %v841 = vsel %vm837, %v328, %v441
        %v842 = vsel %vm837, %v365, %v443
        %v843 = vsel %vm837, %v330, %v445
        %v844 = vsel %vm837, %v366, %v447
        %v845 = vsel %vm837, %v332, %v449
        %v846 = vsel %vm837, %v367, %v451
        %v847 = vsel %vm837, %v334, %v453
        %v848 = vsel %vm837, %v368, %v455
        %v849 = vsel %vm837, %v336, %v457
        %v850 = vsel %vm837, %v369, %v459
        %v851 = vsel %vm837, %v338, %v461
        %v852 = vsel %vm837, %v370, %v463
        %v853 = vsel %vm837, %v340, %v465
        %vm854 = vcmask 64512
        %v855 = vsel %vm854, %v838, %v491
        %v856 = vsel %vm854, %v839, %v493
        %v857 = vsel %vm854, %v840, %v495
        %v858 = vsel %vm854, %v841, %v497
        %v859 = vsel %vm854, %v842, %v499
        %v860 = vsel %vm854, %v843, %v501
        %v861 = vsel %vm854, %v844, %v503
        %v862 = vsel %vm854, %v845, %v505
        %v863 = vsel %vm854, %v846, %v507
        %v864 = vsel %vm854, %v847, %v509
        %v865 = vsel %vm854, %v848, %v511
        %v866 = vsel %vm854, %v849, %v513
        %v867 = vsel %vm854, %v850, %v515
        %v868 = vsel %vm854, %v851, %v517
        %v869 = vsel %vm854, %v852, %v519
        %v870 = vsel %vm854, %v853, %v521
        %vm871 = vcmask 97280
        %v872 = vsel %vm871, %v855, %v547
        %v873 = vsel %vm871, %v856, %v549
        %v874 = vsel %vm871, %v857, %v551
        %v875 = vsel %vm871, %v858, %v553
        %v876 = vsel %vm871, %v859, %v555
        %v877 = vsel %vm871, %v860, %v557
        %v878 = vsel %vm871, %v861, %v559
        %v879 = vsel %vm871, %v862, %v561
        %v880 = vsel %vm871, %v863, %v563
        %v881 = vsel %vm871, %v864, %v565
        %v882 = vsel %vm871, %v865, %v567
        %v883 = vsel %vm871, %v866, %v569
        %v884 = vsel %vm871, %v867, %v571
        %v885 = vsel %vm871, %v868, %v573
        %v886 = vsel %vm871, %v869, %v575
        %v887 = vsel %vm871, %v870, %v577
        %vm888 = vcmask 130048
        %v889 = vsel %vm888, %v872, %v595
        %v890 = vsel %vm888, %v873, %v597
        %v891 = vsel %vm888, %v874, %v599
        %v892 = vsel %vm888, %v875, %v601
        %v893 = vsel %vm888, %v876, %v603
        %v894 = vsel %vm888, %v877, %v605
        %v895 = vsel %vm888, %v878, %v607
        %v896 = vsel %vm888, %v879, %v609
        %v897 = vsel %vm888, %v880, %v611
        %v898 = vsel %vm888, %v881, %v613
        %v899 = vsel %vm888, %v882, %v615
        %v900 = vsel %vm888, %v883, %v617
        %v901 = vsel %vm888, %v884, %v619
        %v902 = vsel %vm888, %v885, %v621
        %v903 = vsel %vm888, %v886, %v623
        %v904 = vsel %vm888, %v887, %v625
        %vm905 = vcmask 162816
        %v906 = vsel %vm905, %v889, %v644
        %v907 = vsel %vm905, %v890, %v646
        %v908 = vsel %vm905, %v891, %v648
        %v909 = vsel %vm905, %v892, %v650
        %v910 = vsel %vm905, %v893, %v652
        %v911 = vsel %vm905, %v894, %v654
        %v912 = vsel %vm905, %v895, %v656
        %v913 = vsel %vm905, %v896, %v658
        %v914 = vsel %vm905, %v897, %v660
        %v915 = vsel %vm905, %v898, %v662
        %v916 = vsel %vm905, %v899, %v664
        %v917 = vsel %vm905, %v900, %v666
        %v918 = vsel %vm905, %v901, %v668
        %v919 = vsel %vm905, %v902, %v670
        %v920 = vsel %vm905, %v903, %v672
        %v921 = vsel %vm905, %v904, %v674
        %vm922 = vcmask 195584
        %v923 = vsel %vm922, %v906, %v693
        %v924 = vsel %vm922, %v907, %v695
        %v925 = vsel %vm922, %v908, %v697
        %v926 = vsel %vm922, %v909, %v699
        %v927 = vsel %vm922, %v910, %v701
        %v928 = vsel %vm922, %v911, %v703
        %v929 = vsel %vm922, %v912, %v705
        %v930 = vsel %vm922, %v913, %v707
        %v931 = vsel %vm922, %v914, %v709
        %v932 = vsel %vm922, %v915, %v711
        %v933 = vsel %vm922, %v916, %v713
        %v934 = vsel %vm922, %v917, %v715
        %v935 = vsel %vm922, %v918, %v717
        %v936 = vsel %vm922, %v919, %v719
        %v937 = vsel %vm922, %v920, %v721
        %v938 = vsel %vm922, %v921, %v723
        %vm939 = vcmask 228352
        %v940 = vsel %vm939, %v923, %v741
        %v941 = vsel %vm939, %v924, %v743
        %v942 = vsel %vm939, %v925, %v745
        %v943 = vsel %vm939, %v926, %v747
        %v944 = vsel %vm939, %v927, %v749
        %v945 = vsel %vm939, %v928, %v751
        %v946 = vsel %vm939, %v929, %v753
        %v947 = vsel %vm939, %v930, %v755
        %v948 = vsel %vm939, %v931, %v757
        %v949 = vsel %vm939, %v932, %v759
        %v950 = vsel %vm939, %v933, %v761
        %v951 = vsel %vm939, %v934, %v763
        %v952 = vsel %vm939, %v935, %v765
        %v953 = vsel %vm939, %v936, %v767
        %v954 = vsel %vm939, %v937, %v769
        %v955 = vsel %vm939, %v938, %v771
        %vm956 = vcmask 261120
        %v957 = vsel %vm956, %v940, %v790
        %v958 = vsel %vm956, %v941, %v792
        %v959 = vsel %vm956, %v942, %v794
        %v960 = vsel %vm956, %v943, %v796
        %v961 = vsel %vm956, %v944, %v798
        %v962 = vsel %vm956, %v945, %v800
        %v963 = vsel %vm956, %v946, %v802
        %v964 = vsel %vm956, %v947, %v804
        %v965 = vsel %vm956, %v948, %v806
        %v966 = vsel %vm956, %v949, %v808
        %v967 = vsel %vm956, %v950, %v810
        %v968 = vsel %vm956, %v951, %v812
        %v969 = vsel %vm956, %v952, %v814
        %v970 = vsel %vm956, %v953, %v816
        %v971 = vsel %vm956, %v954, %v818
        %v972 = vsel %vm956, %v955, %v820
        %v973 = vld [vmem:[%s2] sm:$0xff]
        %v974 = vld [vmem:[%s2 + $0x8] sm:$0xff]
        %v975 = vld [vmem:[%s2 + $0x10] sm:$0xff]
        %v976 = vld [vmem:[%s2 + $0x18] sm:$0xff]
        %v977 = vld [vmem:[%s2 + $0x20] sm:$0xf]
        %v978 = vld [vmem:[%s3] sm:$0x1]
        %v980 = vlaneseq
        %v981 = vshrl.u32 %v980, 7
        %v982 = vsub.s32 0, %v981
        %v983 = vrot.slane %v978, %v982
        %vm985 = vcmask 293888
        %v987 = vsel %vm985, %v957, 0
        %v990 = vsel %vm985, %v958, 0
        %v993 = vsel %vm985, %v959, 0
        %v996 = vsel %vm985, %v960, 0
        %v999 = vsel %vm985, %v961, 0
        %v1002 = vsel %vm985, %v962, 0
        %v1005 = vsel %vm985, %v963, 0
        %v1008 = vsel %vm985, %v964, 0
        %v1011 = vsel %vm985, %v965, 0
        %v1014 = vsel %vm985, %v966, 0
        %v1017 = vsel %vm985, %v967, 0
        %v1020 = vsel %vm985, %v968, 0
        %v1023 = vsel %vm985, %v969, 0
        %v1026 = vsel %vm985, %v970, 0
        %v1029 = vsel %vm985, %v971, 0
        %v1032 = vsel %vm985, %v972, 0
        %vm1034 = vcmask 1043456
        %v1036 = vsel %vm1034, %v977, 0
        %1038 = vmatprep.subr.mxu0 0.0
        %1039 = vmatpush1.msra.mxu0 0.0
        %1040 = vmatprep.subr.mxu0 0.0
        %1041 = vmatpush1.msra.mxu0 0.0
        %1042 = vmatprep.subr.mxu0 0.0
        %1043 = vmatpush1.msra.mxu0 0.0
        %1044 = vmatprep.subr.mxu0 0.0
        %1045 = vmatpush1.msra.mxu0 0.0
        %1046 = vmatprep.subr.mxu0 0.0
        %1047 = vmatpush1.msra.mxu0 0.0
        %1048 = vmatprep.subr.mxu0 0.0
        %1049 = vmatpush1.msra.mxu0 0.0
        %1050 = vmatprep.subr.mxu0 0.0
        %1051 = vmatpush1.msra.mxu0 0.0
        %1052 = vmatprep.subr.mxu0 0.0
        %1053 = vmatpush1.msra.mxu0 0.0
        %1054 = vmatprep.subr.mxu0 0.0
        %1055 = vmatpush1.msra.mxu0 0.0
        %1056 = vmatprep.subr.mxu0 0.0
        %1057 = vmatpush1.msra.mxu0 0.0
        %1058 = vmatprep.subr.mxu0 0.0
        %1059 = vmatpush1.msra.mxu0 0.0
        %1060 = vmatprep.subr.mxu0 0.0
        %1061 = vmatpush1.msra.mxu0 %v1036
        %1062 = vmatprep.subr.mxu0 0.0
        %1063 = vmatpush1.msra.mxu0 %v976
        %1064 = vmatprep.subr.mxu0 0.0
        %1065 = vmatpush1.msra.mxu0 %v975
        %1066 = vmatprep.subr.mxu0 0.0
        %1067 = vmatpush1.msra.mxu0 %v974
        %1068 = vmatprep.subr.mxu0 0.0
        %1069 = vmatpush1.msra.mxu0 %v973
        %1070 = vmatprep.subr.mxu0 0.0
        %1071 = vmatpush2.msra.mxu0 0.0
        %1072 = vmatprep.subr.mxu0 0.0
        %1073 = vmatpush2.msra.mxu0 0.0
        %1074 = vmatprep.subr.mxu0 0.0
        %1075 = vmatpush2.msra.mxu0 0.0
        %1076 = vmatprep.subr.mxu0 0.0
        %1077 = vmatpush2.msra.mxu0 0.0
        %1078 = vmatprep.subr.mxu0 0.0
        %1079 = vmatpush2.msra.mxu0 0.0
        %1080 = vmatprep.subr.mxu0 0.0
        %1081 = vmatpush2.msra.mxu0 0.0
        %1082 = vmatprep.subr.mxu0 0.0
        %1083 = vmatpush2.msra.mxu0 0.0
        %1084 = vmatprep.subr.mxu0 0.0
        %1085 = vmatpush2.msra.mxu0 0.0
        %1086 = vmatprep.subr.mxu0 0.0
        %1087 = vmatpush2.msra.mxu0 0.0
        %1088 = vmatprep.subr.mxu0 0.0
        %1089 = vmatpush2.msra.mxu0 0.0
        %1090 = vmatprep.subr.mxu0 0.0
        %1091 = vmatpush2.msra.mxu0 0.0
        %1092 = vmatprep.subr.mxu0 0.0
        %1093 = vmatpush2.msra.mxu0 0.0
        %1094 = vmatprep.subr.mxu0 0.0
        %1095 = vmatpush2.msra.mxu0 0.0
        %1096 = vmatprep.subr.mxu0 0.0
        %1097 = vmatpush2.msra.mxu0 0.0
        %1098 = vmatprep.subr.mxu0 0.0
        %1099 = vmatpush2.msra.mxu0 0.0
        %1100 = vmatprep.subr.mxu0 0.0
        %1101 = vmatpush2.msra.mxu0 0.0
        %1102 = vmatprep.mubr.f32.mxu0 0.0
        %1103 = vmatmul.mubr.f32.gmra.mxu0 %v987
        %v1104 = vpop.f32.mrf.mxu0
        %v1105 = vadd.f32 %v983, %v1104
        %v1106 = vpop.f32.mrf.mxu0
        %1107 = vmatprep.mubr.f32.mxu0 0.0
        %1108 = vmatmul.mubr.f32.gmra.mxu0 %v990
        %v1109 = vpop.f32.mrf.mxu0
        %v1110 = vadd.f32 %v983, %v1109
        %v1111 = vpop.f32.mrf.mxu0
        %1112 = vmatprep.mubr.f32.mxu0 0.0
        %1113 = vmatmul.mubr.f32.gmra.mxu0 %v993
        %v1114 = vpop.f32.mrf.mxu0
        %v1115 = vadd.f32 %v983, %v1114
        %v1116 = vpop.f32.mrf.mxu0
        %1117 = vmatprep.mubr.f32.mxu0 0.0
        %1118 = vmatmul.mubr.f32.gmra.mxu0 %v996
        %v1119 = vpop.f32.mrf.mxu0
        %v1120 = vadd.f32 %v983, %v1119
        %v1121 = vpop.f32.mrf.mxu0
        %1122 = vmatprep.mubr.f32.mxu0 0.0
        %1123 = vmatmul.mubr.f32.gmra.mxu0 %v999
        %v1124 = vpop.f32.mrf.mxu0
        %v1125 = vadd.f32 %v983, %v1124
        %v1126 = vpop.f32.mrf.mxu0
        %1127 = vmatprep.mubr.f32.mxu0 0.0
        %1128 = vmatmul.mubr.f32.gmra.mxu0 %v1002
        %v1129 = vpop.f32.mrf.mxu0
        %v1130 = vadd.f32 %v983, %v1129
        %v1131 = vpop.f32.mrf.mxu0
        %1132 = vmatprep.mubr.f32.mxu0 0.0
        %1133 = vmatmul.mubr.f32.gmra.mxu0 %v1005
        %v1134 = vpop.f32.mrf.mxu0
        %v1135 = vadd.f32 %v983, %v1134
        %v1136 = vpop.f32.mrf.mxu0
        %1137 = vmatprep.mubr.f32.mxu0 0.0
        %1138 = vmatmul.mubr.f32.gmra.mxu0 %v1008
        %v1139 = vpop.f32.mrf.mxu0
        %v1140 = vadd.f32 %v983, %v1139
        %v1141 = vpop.f32.mrf.mxu0
        %1142 = vmatprep.mubr.f32.mxu0 0.0
        %1143 = vmatmul.mubr.f32.gmra.mxu0 %v1011
        %v1144 = vpop.f32.mrf.mxu0
        %v1145 = vadd.f32 %v983, %v1144
        %v1146 = vpop.f32.mrf.mxu0
        %1147 = vmatprep.mubr.f32.mxu0 0.0
        %1148 = vmatmul.mubr.f32.gmra.mxu0 %v1014
        %v1149 = vpop.f32.mrf.mxu0
        %v1150 = vadd.f32 %v983, %v1149
        %v1151 = vpop.f32.mrf.mxu0
        %1152 = vmatprep.mubr.f32.mxu0 0.0
        %1153 = vmatmul.mubr.f32.gmra.mxu0 %v1017
        %v1154 = vpop.f32.mrf.mxu0
        %v1155 = vadd.f32 %v983, %v1154
        %v1156 = vpop.f32.mrf.mxu0
        %1157 = vmatprep.mubr.f32.mxu0 0.0
        %1158 = vmatmul.mubr.f32.gmra.mxu0 %v1020
        %v1159 = vpop.f32.mrf.mxu0
        %v1160 = vadd.f32 %v983, %v1159
        %v1161 = vpop.f32.mrf.mxu0
        %1162 = vmatprep.mubr.f32.mxu0 0.0
        %1163 = vmatmul.mubr.f32.gmra.mxu0 %v1023
        %v1164 = vpop.f32.mrf.mxu0
        %v1165 = vadd.f32 %v983, %v1164
        %v1166 = vpop.f32.mrf.mxu0
        %1167 = vmatprep.mubr.f32.mxu0 0.0
        %1168 = vmatmul.mubr.f32.gmra.mxu0 %v1026
        %v1169 = vpop.f32.mrf.mxu0
        %v1170 = vadd.f32 %v983, %v1169
        %v1171 = vpop.f32.mrf.mxu0
        %1172 = vmatprep.mubr.f32.mxu0 0.0
        %1173 = vmatmul.mubr.f32.gmra.mxu0 %v1029
        %v1174 = vpop.f32.mrf.mxu0
        %v1175 = vadd.f32 %v983, %v1174
        %v1176 = vpop.f32.mrf.mxu0
        %1177 = vmatprep.mubr.f32.mxu0 0.0
        %1178 = vmatmul.mubr.f32.gmra.mxu0 %v1032
        %v1179 = vpop.f32.mrf.mxu0
        %v1180 = vadd.f32 %v983, %v1179
        %v1181 = vpop.f32.mrf.mxu0
        %1182 = vdwg.mxu0
        %1183 = vst.msk [vmem:[%s242] sm:$0xff] %vm888, %v1105
        %1184 = vst.msk [vmem:[%s242 + $0x8] sm:$0xff] %vm888, %v1110
        %1185 = vst.msk [vmem:[%s242 + $0x10] sm:$0xff] %vm888, %v1115
        %1186 = vst.msk [vmem:[%s242 + $0x18] sm:$0xff] %vm888, %v1120
        %1187 = vst.msk [vmem:[%s242 + $0x20] sm:$0xff] %vm888, %v1125
        %1188 = vst.msk [vmem:[%s242 + $0x28] sm:$0xff] %vm888, %v1130
        %1189 = vst.msk [vmem:[%s242 + $0x30] sm:$0xff] %vm888, %v1135
        %1190 = vst.msk [vmem:[%s242 + $0x38] sm:$0xff] %vm888, %v1140
        %1191 = vst.msk [vmem:[%s242 + $0x40] sm:$0xff] %vm888, %v1145
        %1192 = vst.msk [vmem:[%s242 + $0x48] sm:$0xff] %vm888, %v1150
        %1193 = vst.msk [vmem:[%s242 + $0x50] sm:$0xff] %vm888, %v1155
        %1194 = vst.msk [vmem:[%s242 + $0x58] sm:$0xff] %vm888, %v1160
        %1195 = vst.msk [vmem:[%s242 + $0x60] sm:$0xff] %vm888, %v1165
        %1196 = vst.msk [vmem:[%s242 + $0x68] sm:$0xff] %vm888, %v1170
        %1197 = vst.msk [vmem:[%s242 + $0x70] sm:$0xff] %vm888, %v1175
        %1198 = vst.msk [vmem:[%s242 + $0x78] sm:$0xff] %vm888, %v1180
        %s1199 = sand.u32 %s138, 1
        %s1200 = scalar_lea.sflag [#allocation3], %s1199
        %s1201 = sand.u32 %s138, 1
        %s1202 = smul.addr %s1201, 128
        %s1203 = scalar_lea.vmem [#allocation2], %s1202
        // Predicated region
        $region37: #{tpu_custom_call.1} parent=35 // pred_check
          %p1204 = pneg %p148
        $region38: #{tpu_custom_call.1} parent=35 // pred_check_branch
          %1206 = sbr.rel (%p1204) target = $region40
        $region39: #{tpu_custom_call.1} parent=35 // pred_region
          %s1207 = smul.u32 8, %s23
          %s1209 = ssub.s32 2048, 2048
          %1210 = vsyncadd %s1200, %s1209
          %s1211 = smul.addr %s1207, 2
          %s1212 = smul.addr %s22, 32
          %s1213 = sadd.s32 %s1211, %s1212
          %s1214 = smul.addr %s1213, 128
          %s1215 = scalar_lea.hbm %s4, %s1214
          %s1216 = sshll.u32 %s1203, 4
          %s1217 = int_to_ptr.vmem [resolvable:$true] %s1216
          %1222 = dma.vmem_to_hbm [thread:$0]  %s1217, 2048, %s1215, %s1200, 128, 128, 8
        $region40: #{tpu_custom_call.1} parent=35 // pred_fallthru
          _
      $region36: #{tpu_custom_call.1} parent=5 // pred_fallthru
        _
      %p1223 = scmp.le.s32.totalorder 2, %s13
      // Predicated region
      $region41: #{tpu_custom_call.1} parent=5 // pred_check
        %p1224 = pneg %p1223
      $region42: #{tpu_custom_call.1} parent=5 // pred_check_branch
        %1226 = sbr.rel (%p1224) target = $region44
      $region43: #{tpu_custom_call.1} parent=5 // pred_region
        %s1227 = ssub.s32 %s13, 2
        // Predicated region
        $region45: #{tpu_custom_call.1} parent=43 // pred_check
          %p1228 = pneg %p154
        $region46: #{tpu_custom_call.1} parent=43 // pred_check_branch
          %1230 = sbr.rel (%p1228) target = $region48
        $region47: #{tpu_custom_call.1} parent=43 // pred_region
          %s1231 = sand.u32 %s139, 1
          %s1232 = scalar_lea.sflag [#allocation3], %s1231
          %s1233 = sand.u32 %s139, 1
          %s1234 = smul.addr %s1233, 128
          %s1235 = scalar_lea.vmem [#allocation2], %s1234
          %1236 = dma.done %s1232, 2048
        $region48: #{tpu_custom_call.1} parent=43 // pred_fallthru
          _
      $region44: #{tpu_custom_call.1} parent=5 // pred_fallthru
        _
    $region6: #{tpu_custom_call.1} parent=1 // loop_footer
      %s17 = sadd.s32 1, %s13
    $region7: #{tpu_custom_call.1} parent=1 // loop_footer_branch
      %12 = sbr.rel target = $region3
    $region8: #{tpu_custom_call.1} parent=1 // loop_exit
      _
    %1237 = vsyncpa [#allocation3], 1
    %s1238 = scalar_lea.sflag [#allocation3], 1
    %1239 = vsyncpa %s1238, 1

</llo_original>
